<compile_context>
chip_gen: v5e
topology: v5e:2x2
jax: 0.10.0
libtpu: 0.0.40
codegen_flags: <defaults>
</compile_context>

<pallas_src>
import jax
import jax.numpy as jnp
from jax.experimental import pallas as pl
from jax.experimental.pallas import tpu as pltpu


def _round_up(x, m):
    return ((x + m - 1) // m) * m


def _make_kernel(B, N_PTS, C_IN, W, NC, r_pool, r_whd, r_blt, r_bhd):
    """Fused MainModel forward for fixed static dims.

    Constant-slab layout (rows x 128 lanes, f32, all slices sublane-aligned,
    lane offset 0):
      rows [0, C_IN)        cols [0, W)        : w_lt^T    (K-major)
      rows [r_pool, +B)     cols [0, B*N_PTS)  : pooling matrix P (mean over pts)
      rows [r_whd,  +NC)    cols [0, NC)       : w_head^T  (K-major)
      row   r_blt           cols [0, W)        : b_lt
      row   r_bhd           cols [0, NC)       : b_head
    """
    BN = B * N_PTS

    def kernel(lst_ref, img_ref, const_ref, pred_ref):
        # ---- static views into the single packed constant slab (one DMA) ----
        w_lt_t = const_ref[pl.ds(0, C_IN), pl.ds(0, W)]        # (C_IN, W)
        pool   = const_ref[pl.ds(r_pool, B), pl.ds(0, BN)]     # (B, B*N_PTS)
        w_hd_t = const_ref[pl.ds(r_whd, NC), pl.ds(0, NC)]     # (NC, NC)
        b_lt   = const_ref[pl.ds(r_blt, 1), pl.ds(0, W)]       # (1, W)
        b_head = const_ref[pl.ds(r_bhd, 1), pl.ds(0, NC)]      # (1, NC)

        # --- cloud pooling on the MXU: x = P @ lst_flat -> (B, C_IN) ---
        # (replaces the XLU sublane reduce of lst_feature.mean(dim=1))
        x = jnp.dot(pool, lst_ref[...], preferred_element_type=jnp.float32)

        # --- linear_textfeature: ext = x @ w_lt^T + b_lt -> (B, W) ---
        # weight is pre-transposed host-side -> plain K-major contraction.
        ext = jnp.dot(x, w_lt_t, preferred_element_type=jnp.float32) + b_lt

        # TODO(synk): diffusionModel, clippreprocess, CLIP encode_image /
        # encode_text_extfeature and the point-cloud backbone are external
        # modules with no Pallas equivalent; text features are proxied by the
        # ext_feature branch and image features are a synthetic kernel input.
        txt = ext                      # (NC, W)
        img = img_ref[...]             # (NI, W)

        # --- L2 row-normalization (rsqrt rides the EUP slot) ---
        txt = txt * jax.lax.rsqrt(jnp.sum(txt * txt, axis=1, keepdims=True))
        img = img * jax.lax.rsqrt(jnp.sum(img * img, axis=1, keepdims=True))

        # --- logits_per_image = img @ txt^T -> (NI, NC) ---
        # exp(logit_scale) omitted: a positive scalar cancels exactly under the
        # sum-normalization below.
        logits = jax.lax.dot_general(
            img, txt, (((1,), (1,)), ((), ())),
            preferred_element_type=jnp.float32)

        # --- sum-normalization folded into the head epilogue:
        #     pred = s * (logits @ w_head^T) + b_head,  s = numel / sum(logits)
        numel = jnp.float32(logits.shape[0] * logits.shape[1])
        total = jnp.sum(logits, keepdims=True)                          # (1, 1)
        s = numel * pl.reciprocal(total, approx=False)
        pred_ref[...] = (
            s * jnp.dot(logits, w_hd_t, preferred_element_type=jnp.float32)
            + b_head)

    return kernel


def make_main_model_fn(w_lt, b_lt, w_head, b_head, *, num_points):
    """Packs MainModel's own parameters once (host-side) into a single
    (rows, 128) f32 constant slab and returns the fused forward function.

    w_lt: (W, C_IN), b_lt: (W,)      -- linear_textfeature (PyTorch layout)
    w_head: (NC, NC), b_head: (NC,)  -- classificationHead (modeled as Linear)
    """
    W, C_IN = w_lt.shape
    NC = w_head.shape[0]
    B = NC                      # cloud batch == number of classes on this path
    N_PTS = num_points
    BN = B * N_PTS

    assert max(W, BN, NC) <= 128, "constant slab layout assumes <= 128 lanes"

    # Row layout: everything starts at a sublane-aligned row, lane offset 0.
    r_pool = _round_up(C_IN, 8)
    r_whd = r_pool + _round_up(B, 8)
    r_blt = r_whd + _round_up(NC, 8)
    r_bhd = r_blt + 8
    rows = r_bhd + 8

    pool = (jnp.kron(jnp.eye(B, dtype=jnp.float32),
                     jnp.ones((1, N_PTS), jnp.float32)) / N_PTS)   # (B, BN)

    slab = jnp.zeros((rows, 128), jnp.float32)
    slab = slab.at[0:C_IN, 0:W].set(w_lt.T)                        # K-major
    slab = slab.at[r_pool:r_pool + B, 0:BN].set(pool)
    slab = slab.at[r_whd:r_whd + NC, 0:NC].set(w_head.T)           # K-major
    slab = slab.at[r_blt, 0:W].set(b_lt)
    slab = slab.at[r_bhd, 0:NC].set(b_head)

    kernel = _make_kernel(B, N_PTS, C_IN, W, NC, r_pool, r_whd, r_blt, r_bhd)
    vmem = pl.BlockSpec(memory_space=pltpu.MemorySpace.VMEM)

    def forward(lst_feature, image_features, logit_scale=None):
        # exp(logit_scale) cancels exactly under logits /= logits.sum().
        del logit_scale
        assert lst_feature.shape == (B, N_PTS, C_IN)
        NI = image_features.shape[0]
        lst_flat = lst_feature.reshape(BN, C_IN)   # feeds the MXU pooling matmul
        return pl.pallas_call(
            kernel,
            out_shape=jax.ShapeDtypeStruct((NI, NC), jnp.float32),
            in_specs=[vmem, vmem, vmem],
            out_specs=vmem,
        )(lst_flat, image_features, slab)

    return forward


def _reference(lst_feature, image_features, w_lt, b_lt, w_head, b_head, logit_scale):
    x = jnp.mean(lst_feature, axis=1)
    txt = x @ w_lt.T + b_lt
    img = image_features
    txt = txt / jnp.linalg.norm(txt, axis=1, keepdims=True)
    img = img / jnp.linalg.norm(img, axis=1, keepdims=True)
    logits = jnp.exp(logit_scale) * (img @ txt.T)   # scale kept to verify cancellation
    logits = logits / jnp.sum(logits)
    logits = logits * (logits.shape[0] * logits.shape[1])
    return logits @ w_head.T + b_head


if __name__ == "__main__":
    # Small shapes implied by the forward:
    #   classes = 4, multi = 2  -> NI = 8 generated images
    #   nblocks = 2             -> C_in = 32 * 2**2 = 128
    #   transformer_width W = 32, N_points = 16, B_cloud = num_classes = 4
    NC, MULTI = 4, 2
    NI = NC * MULTI
    NBLOCKS = 2
    C_IN = 32 * 2 ** NBLOCKS
    W = 32
    N_PTS = 16

    key = jax.random.PRNGKey(0)
    k = jax.random.split(key, 6)

    lst_feature = jax.random.normal(k[0], (NC, N_PTS, C_IN), dtype=jnp.float32)
    image_features = jax.random.normal(k[1], (NI, W), dtype=jnp.float32)

    # linear_textfeature = nn.Linear(32 * 2**nblocks, transformer_width)
    w_lt = jax.random.normal(k[2], (W, C_IN), dtype=jnp.float32) * 0.02
    b_lt = jax.random.normal(k[3], (W,), dtype=jnp.float32) * 0.01
    # classificationHead modeled as nn.Linear(num_classes, num_classes)
    w_head = jax.random.normal(k[4], (NC, NC), dtype=jnp.float32) * 0.1
    b_head = jax.random.normal(k[5], (NC,), dtype=jnp.float32) * 0.01
    # CLIP logit_scale parameter (pre-exp), default ln(1/0.07) -- cancels.
    logit_scale = jnp.float32(jnp.log(1.0 / 0.07))

    forward = make_main_model_fn(w_lt, b_lt, w_head, b_head, num_points=N_PTS)
    pred = forward(lst_feature, image_features, logit_scale)
    pred = jax.block_until_ready(pred)

    ref = _reference(lst_feature, image_features,
                     w_lt, b_lt, w_head, b_head, logit_scale)
    assert pred.shape == (NI, NC)
    assert jnp.allclose(pred, ref, atol=2e-3, rtol=2e-3), "mismatch vs reference"

    print("KERNEL_OK")
</pallas_src>

<mosaic_0001>
module attributes {stable_mosaic.version = 11 : i64} {
  func.func @kernel(%arg0: memref<64x128xf32, #tpu.memory_space<vmem>>, %arg1: memref<8x32xf32, #tpu.memory_space<vmem>>, %arg2: memref<160x128xf32, #tpu.memory_space<vmem>>, %arg3: memref<8x4xf32, #tpu.memory_space<vmem>>) attributes {dimension_semantics = [], scalar_prefetch = 0 : i64, scratch_operands = 0 : i64, tpu.core_type = #tpu.core_type<tc>} {
    %c0 = arith.constant 0 : index
    %c0_0 = arith.constant 0 : index
    %0 = vector.load %arg2[%c0, %c0_0] : memref<160x128xf32, #tpu.memory_space<vmem>>, vector<128x32xf32>
    %c128 = arith.constant 128 : index
    %c0_1 = arith.constant 0 : index
    %1 = vector.load %arg2[%c128, %c0_1] : memref<160x128xf32, #tpu.memory_space<vmem>>, vector<4x64xf32>
    %c136 = arith.constant 136 : index
    %c0_2 = arith.constant 0 : index
    %2 = vector.load %arg2[%c136, %c0_2] : memref<160x128xf32, #tpu.memory_space<vmem>>, vector<4x4xf32>
    %c144 = arith.constant 144 : index
    %c0_3 = arith.constant 0 : index
    %3 = vector.load %arg2[%c144, %c0_3] : memref<160x128xf32, #tpu.memory_space<vmem>>, vector<1x32xf32>
    %c152 = arith.constant 152 : index
    %c0_4 = arith.constant 0 : index
    %4 = vector.load %arg2[%c152, %c0_4] : memref<160x128xf32, #tpu.memory_space<vmem>>, vector<1x4xf32>
    %c0_5 = arith.constant 0 : index
    %c0_6 = arith.constant 0 : index
    %5 = vector.load %arg0[%c0_5, %c0_6] : memref<64x128xf32, #tpu.memory_space<vmem>>, vector<64x128xf32>
    %cst = arith.constant dense<0.000000e+00> : vector<4x128xf32>
    %6 = tpu.matmul %1, %5, %cst {dimension_numbers = #tpu.dot_dimension_numbers<[1], [0], [0], [1], [0, 0, 1, 1], [], []>} : vector<4x64xf32>, vector<64x128xf32>, vector<4x128xf32> -> vector<4x128xf32>
    %cst_7 = arith.constant dense<0.000000e+00> : vector<4x32xf32>
    %7 = tpu.matmul %6, %0, %cst_7 {dimension_numbers = #tpu.dot_dimension_numbers<[1], [0], [0], [1], [0, 0, 1, 1], [], []>} : vector<4x128xf32>, vector<128x32xf32>, vector<4x32xf32> -> vector<4x32xf32>
    %8 = vector.broadcast %3 : vector<1x32xf32> to vector<4x32xf32>
    %9 = arith.addf %7, %8 : vector<4x32xf32>
    %c0_8 = arith.constant 0 : index
    %c0_9 = arith.constant 0 : index
    %10 = vector.load %arg1[%c0_8, %c0_9] : memref<8x32xf32, #tpu.memory_space<vmem>>, vector<8x32xf32>
    %11 = arith.mulf %9, %9 : vector<4x32xf32>
    %cst_10 = arith.constant dense<0.000000e+00> : vector<4xf32>
    %12 = vector.multi_reduction <add>, %11, %cst_10 [1] : vector<4x32xf32> to vector<4xf32>
    %13 = vector.shape_cast %12 : vector<4xf32> to vector<4x1xf32>
    %14 = math.rsqrt %13 : vector<4x1xf32>
    %15 = vector.broadcast %14 : vector<4x1xf32> to vector<4x32xf32>
    %16 = arith.mulf %9, %15 : vector<4x32xf32>
    %17 = arith.mulf %10, %10 : vector<8x32xf32>
    %cst_11 = arith.constant dense<0.000000e+00> : vector<8xf32>
    %18 = vector.multi_reduction <add>, %17, %cst_11 [1] : vector<8x32xf32> to vector<8xf32>
    %19 = vector.shape_cast %18 : vector<8xf32> to vector<8x1xf32>
    %20 = math.rsqrt %19 : vector<8x1xf32>
    %21 = vector.broadcast %20 : vector<8x1xf32> to vector<8x32xf32>
    %22 = arith.mulf %10, %21 : vector<8x32xf32>
    %cst_12 = arith.constant dense<0.000000e+00> : vector<8x4xf32>
    %23 = tpu.matmul %22, %16, %cst_12 {dimension_numbers = #tpu.dot_dimension_numbers<[1], [1], [0], [0], [0, 0, 1, 0], [], []>} : vector<8x32xf32>, vector<4x32xf32>, vector<8x4xf32> -> vector<8x4xf32>
    %24 = vector.shape_cast %23 : vector<8x4xf32> to vector<1x8x4xf32>
    %cst_13 = arith.constant dense<0.000000e+00> : vector<1xf32>
    %25 = vector.multi_reduction <add>, %24, %cst_13 [1, 2] : vector<1x8x4xf32> to vector<1xf32>
    %26 = vector.shape_cast %25 : vector<1xf32> to vector<1x1x1xf32>
    %27 = vector.extract %26[0, 0, 0] : f32 from vector<1x1x1xf32>
    %28 = vector.broadcast %27 : f32 to vector<1x1xf32>
    %29 = tpu.reciprocal %28 : vector<1x1xf32> -> vector<1x1xf32>
    %cst_14 = arith.constant 3.200000e+01 : f32
    %30 = vector.broadcast %cst_14 : f32 to vector<1x1xf32>
    %31 = arith.mulf %30, %29 : vector<1x1xf32>
    %cst_15 = arith.constant dense<0.000000e+00> : vector<8x4xf32>
    %32 = tpu.matmul %23, %2, %cst_15 {dimension_numbers = #tpu.dot_dimension_numbers<[1], [0], [0], [1], [0, 0, 1, 1], [], []>} : vector<8x4xf32>, vector<4x4xf32>, vector<8x4xf32> -> vector<8x4xf32>
    %33 = vector.broadcast %31 : vector<1x1xf32> to vector<8x4xf32>
    %34 = arith.mulf %33, %32 : vector<8x4xf32>
    %35 = vector.broadcast %4 : vector<1x4xf32> to vector<8x4xf32>
    %36 = arith.addf %34, %35 : vector<8x4xf32>
    %c0_16 = arith.constant 0 : index
    %c0_17 = arith.constant 0 : index
    %37 = vector.load %arg3[%c0_16, %c0_17] : memref<8x4xf32, #tpu.memory_space<vmem>>, vector<8x4xf32>
    tpu.vector_store %arg3[%c0_16, %c0_17], %36 {strides = array<i32>} : memref<8x4xf32, #tpu.memory_space<vmem>>, vector<8x4xf32>,
    return
  }
}

</mosaic_0001>

<llo_original>
// kernel: tpu_custom_call.1
$region0: #{tpu_custom_call.1}
  #allocation0 [shape = 'u32[]', space=smem, size = 0x4, offset = 0x4, fixed_abs, tag = 'smem constant byte address 0x4 - core index']
  #allocation1 [shape = 'u32[72,128]{1,0:T(1,128)}', space=vmem, size = 0x9000, scoped, tag = 'internal scratch']
  %s0 = inlined_call_operand.hbm [shape: f32[64,128], index: 0, kind: input, shape index: {}]
  %s1 = inlined_call_operand.hbm [shape: f32[8,32], index: 1, kind: input, shape index: {}]
  %s2 = inlined_call_operand.hbm [shape: f32[160,128], index: 2, kind: input, shape index: {}]
  %s3 = inlined_call_operand.vmem [shape: f32[8,4], index: 3, kind: output, shape index: {}]
  %s4 = sld [smem:[#allocation0]]
  $region34: #{tpu_custom_call.1} parent=0
    _
  %s6 = ssub.s32 1, %s4
  %s7 = scalar_select 0, %s6, %s4
  $region1: #{tpu_custom_call.1} parent=0
    #allocation2 [shape = 'u8[32768]{0}', space=vmem, size = 0x8000, scoped, tag = 'input window, operand 0, single buffered']
    #allocation3 [shape = 's32[1]{0}', space=sflag, size = 0x4, scoped, tag = 'scoped memory for tpu_custom_call.1']
    #allocation4 [shape = 'u8[4096]{0}', space=vmem, size = 0x1000, scoped, tag = 'input window, operand 1, single buffered']
    #allocation5 [shape = 's32[1]{0}', space=sflag, size = 0x4, scoped, tag = 'scoped memory for tpu_custom_call.1']
    #allocation6 [shape = 'u8[81920]{0}', space=vmem, size = 0x14000, scoped, tag = 'input window, operand 2, single buffered']
    %8 = vsyncpa [#allocation3], 0
    %9 = vsyncpa [#allocation5], 0
    // Predicated region
    $region2: #{tpu_custom_call.1} parent=1 // pred_check
      _
    $region3: #{tpu_custom_call.1} parent=1 // pred_check_branch
      %11 = sbr.rel (0) target = $region5
    $region4: #{tpu_custom_call.1} parent=1 // pred_region
      %13 = vsyncadd [#allocation3], 0
      %s14 = sshll.u32 %s0, 4
      %s15 = int_to_ptr.hbm [resolvable:$true] %s14
      %s16 = sshll.u32 [#allocation2], 4
      %s17 = int_to_ptr.vmem [resolvable:$true] %s16
      %22 = dma.hbm_to_vmem [thread:$0]  %s15, 1024, %s17, [#allocation3], 128, 128, 8
    $region5: #{tpu_custom_call.1} parent=1 // pred_fallthru
      _
    // Predicated region
    $region6: #{tpu_custom_call.1} parent=1 // pred_check
      _
    $region7: #{tpu_custom_call.1} parent=1 // pred_check_branch
      %24 = sbr.rel (0) target = $region9
    $region8: #{tpu_custom_call.1} parent=1 // pred_region
      %26 = vsyncadd [#allocation5], 0
      %s28 = sshll.u32 %s1, 4
      %s29 = int_to_ptr.hbm [resolvable:$true] %s28
      %s30 = sshll.u32 [#allocation4], 4
      %s31 = int_to_ptr.vmem [resolvable:$true] %s30
      %33 = dma.hbm_to_vmem [thread:$0]  %s29, 128, %s31, [#allocation5]
    $region9: #{tpu_custom_call.1} parent=1 // pred_fallthru
      _
    // Predicated region
    $region10: #{tpu_custom_call.1} parent=1 // pred_check
      _
    $region11: #{tpu_custom_call.1} parent=1 // pred_check_branch
      %35 = sbr.rel (0) target = $region13
    $region12: #{tpu_custom_call.1} parent=1 // pred_region
      %37 = vsyncadd [#allocation5], 0
      %s38 = sshll.u32 %s2, 4
      %s39 = int_to_ptr.hbm [resolvable:$true] %s38
      %s40 = sshll.u32 [#allocation6], 4
      %s41 = int_to_ptr.vmem [resolvable:$true] %s40
      %46 = dma.hbm_to_vmem [thread:$0]  %s39, 2560, %s41, [#allocation5], 128, 128, 8
    $region13: #{tpu_custom_call.1} parent=1 // pred_fallthru
      _
    // Predicated region
    $region14: #{tpu_custom_call.1} parent=1 // pred_check
      _
    $region15: #{tpu_custom_call.1} parent=1 // pred_check_branch
      %48 = sbr.rel (0) target = $region17
    $region16: #{tpu_custom_call.1} parent=1 // pred_region
      %50 = dma.done [#allocation3], 1024
    $region17: #{tpu_custom_call.1} parent=1 // pred_fallthru
      _
    // Predicated region
    $region18: #{tpu_custom_call.1} parent=1 // pred_check
      _
    $region19: #{tpu_custom_call.1} parent=1 // pred_check_branch
      %52 = sbr.rel (0) target = $region21
    $region20: #{tpu_custom_call.1} parent=1 // pred_region
      %54 = dma.done [#allocation5], 128
    $region21: #{tpu_custom_call.1} parent=1 // pred_fallthru
      _
    // Predicated region
    $region22: #{tpu_custom_call.1} parent=1 // pred_check
      _
    $region23: #{tpu_custom_call.1} parent=1 // pred_check_branch
      %56 = sbr.rel (0) target = $region25
    $region24: #{tpu_custom_call.1} parent=1 // pred_region
      %58 = dma.done [#allocation5], 2560
    $region25: #{tpu_custom_call.1} parent=1 // pred_fallthru
      _
    %v59 = vld [vmem:[#allocation6] sm:$0xff]
    %v60 = vld [vmem:[#allocation6 + $0x8] sm:$0xff]
    %v61 = vld [vmem:[#allocation6 + $0x10] sm:$0xff]
    %v62 = vld [vmem:[#allocation6 + $0x18] sm:$0xff]
    %v63 = vld [vmem:[#allocation6 + $0x20] sm:$0xff]
    %v64 = vld [vmem:[#allocation6 + $0x28] sm:$0xff]
    %v65 = vld [vmem:[#allocation6 + $0x30] sm:$0xff]
    %v66 = vld [vmem:[#allocation6 + $0x38] sm:$0xff]
    %v67 = vld [vmem:[#allocation6 + $0x40] sm:$0xff]
    %v68 = vld [vmem:[#allocation6 + $0x48] sm:$0xff]
    %v69 = vld [vmem:[#allocation6 + $0x50] sm:$0xff]
    %v70 = vld [vmem:[#allocation6 + $0x58] sm:$0xff]
    %v71 = vld [vmem:[#allocation6 + $0x60] sm:$0xff]
    %v72 = vld [vmem:[#allocation6 + $0x68] sm:$0xff]
    %v73 = vld [vmem:[#allocation6 + $0x70] sm:$0xff]
    %v74 = vld [vmem:[#allocation6 + $0x78] sm:$0xff]
    %v75 = vld [vmem:[#allocation6 + $0x80] sm:$0xf]
    %v76 = vld [vmem:[#allocation6 + $0x88] sm:$0xf]
    %v77 = vld [vmem:[#allocation6 + $0x90] sm:$0x1]
    %v78 = vld [vmem:[#allocation6 + $0x98] sm:$0x1]
    %v79 = vld [vmem:[#allocation2] sm:$0xff]
    %v80 = vld [vmem:[#allocation2 + $0x8] sm:$0xff]
    %v81 = vld [vmem:[#allocation2 + $0x10] sm:$0xff]
    %v82 = vld [vmem:[#allocation2 + $0x18] sm:$0xff]
    %v83 = vld [vmem:[#allocation2 + $0x20] sm:$0xff]
    %v84 = vld [vmem:[#allocation2 + $0x28] sm:$0xff]
    %v85 = vld [vmem:[#allocation2 + $0x30] sm:$0xff]
    %v86 = vld [vmem:[#allocation2 + $0x38] sm:$0xff]
    %vm87 = vcmask 523264
    %v89 = vsel %vm87, %v75, 0
    %91 = vmatpush.msra.mxu0 0.0
    %92 = vmatpush.msra.mxu0 0.0
    %93 = vmatpush.msra.mxu0 0.0
    %94 = vmatpush.msra.mxu0 0.0
    %95 = vmatpush.msra.mxu0 0.0
    %96 = vmatpush.msra.mxu0 0.0
    %97 = vmatpush.msra.mxu0 0.0
    %98 = vmatpush.msra.mxu0 0.0
    %99 = vmatpush.msra.mxu0 %v86
    %100 = vmatpush.msra.mxu0 %v85
    %101 = vmatpush.msra.mxu0 %v84
    %102 = vmatpush.msra.mxu0 %v83
    %103 = vmatpush.msra.mxu0 %v82
    %104 = vmatpush.msra.mxu0 %v81
    %105 = vmatpush.msra.mxu0 %v80
    %106 = vmatpush.msra.mxu0 %v79
    %107 = vmatmul.f32.gmra.mxu0 %v89
    %v108 = vpop.f32.mrf.mxu0
    %v109 = vadd.f32 0.0, %v108
    %110 = vdwg.mxu0
    %v111 = vperm.slane %v77, 0
    %112 = vmatpush.msra.mxu0 %v74
    %113 = vmatpush.msra.mxu0 %v73
    %114 = vmatpush.msra.mxu0 %v72
    %115 = vmatpush.msra.mxu0 %v71
    %116 = vmatpush.msra.mxu0 %v70
    %117 = vmatpush.msra.mxu0 %v69
    %118 = vmatpush.msra.mxu0 %v68
    %119 = vmatpush.msra.mxu0 %v67
    %120 = vmatpush.msra.mxu0 %v66
    %121 = vmatpush.msra.mxu0 %v65
    %122 = vmatpush.msra.mxu0 %v64
    %123 = vmatpush.msra.mxu0 %v63
    %124 = vmatpush.msra.mxu0 %v62
    %125 = vmatpush.msra.mxu0 %v61
    %126 = vmatpush.msra.mxu0 %v60
    %127 = vmatpush.msra.mxu0 %v59
    %128 = vmatmul.f32.gmra.mxu0 %v109
    %v129 = vpop.f32.mrf.mxu0
    %v130 = vadd.f32 %v111, %v129
    %131 = vdwg.mxu0
    %v132 = vld [vmem:[#allocation4] sm:$0xff]
    %v133 = vmul.f32 %v130, %v130
    %vm134 = vcmask 257024
    %v135 = vsel %vm134, %v133, 0.0
    %136 = vadd.xlane.f32.xlu0 %v135
    %v137 = vpop.xlane.xlu0 %136
    %v138 = vrsqrt.pop %v137
    %v139 = vmul.f32 %v138, %v137
    %v140 = vmul.f32 %v139, %v138
    %v141 = vmul.f32 0.5, %v140
    %v142 = vsub.f32 1.5, %v141
    %v143 = vmul.f32 %v138, %v142
    %vm144 = vweird.f32 %v137
    %vm145 = vweird.f32 %v138
    %vm146 = vmor %vm144, %vm145
    %v147 = vsel %vm146, %v138, %v143
    %v148 = vmul.f32 %v130, %v147
    %v149 = vmul.f32 %v132, %v132
    %vm150 = vcmask 261120
    %v151 = vsel %vm150, %v149, 0.0
    %152 = vadd.xlane.f32.xlu0 %v151
    %v153 = vpop.xlane.xlu0 %152
    %v154 = vrsqrt.pop %v153
    %v155 = vmul.f32 %v154, %v153
    %v156 = vmul.f32 %v155, %v154
    %v157 = vmul.f32 0.5, %v156
    %v158 = vsub.f32 1.5, %v157
    %v159 = vmul.f32 %v154, %v158
    %vm160 = vweird.f32 %v153
    %vm161 = vweird.f32 %v154
    %vm162 = vmor %vm160, %vm161
    %v163 = vsel %vm162, %v154, %v159
    %v164 = vmul.f32 %v132, %v163
    %v166 = vsel %vm150, %v164, 0
    %v169 = vsel %vm150, %v148, 0
    %171 = vmatpush.xpose.msra.mxu0 0.0
    %172 = vmatpush.xpose.msra.mxu0 0.0
    %173 = vmatpush.xpose.msra.mxu0 0.0
    %174 = vmatpush.xpose.msra.mxu0 0.0
    %175 = vmatpush.xpose.msra.mxu0 0.0
    %176 = vmatpush.xpose.msra.mxu0 0.0
    %177 = vmatpush.xpose.msra.mxu0 0.0
    %178 = vmatpush.xpose.msra.mxu0 0.0
    %179 = vmatpush.xpose.msra.mxu0 0.0
    %180 = vmatpush.xpose.msra.mxu0 0.0
    %181 = vmatpush.xpose.msra.mxu0 0.0
    %182 = vmatpush.xpose.msra.mxu0 0.0
    %183 = vmatpush.xpose.msra.mxu0 0.0
    %184 = vmatpush.xpose.msra.mxu0 0.0
    %185 = vmatpush.xpose.msra.mxu0 0.0
    %186 = vmatpush.xpose.msra.mxu0 %v169
    %187 = vmatmul.f32.gmra.mxu0 %v166
    %v188 = vpop.f32.mrf.mxu0
    %v189 = vadd.f32 0.0, %v188
    %190 = vdwg.mxu0
    %vm191 = vcmask 31744
    %v192 = vsel %vm191, %v189, 0.0
    %193 = vadd.xlane.f32.xlu0 %v192
    %v194 = vpop.xlane.xlu0 %193
    %v195 = vrot.slane %v194, 4
    %v196 = vadd.f32 %v194, %v195
    %v197 = vrot.slane %v196, 2
    %v198 = vadd.f32 %v196, %v197
    %v199 = vrot.slane %v198, 1
    %v200 = vadd.f32 %v198, %v199
    %s201 = vtos %v200
    %v202 = vstv %s201
    %v203 = vrcp.pop %v202
    %v204 = vmul.f32 %v202, %v203
    %v205 = vsub.f32 1.0, %v204
    %v206 = vmul.f32 %v203, %v205
    %v207 = vadd.f32 %v203, %v206
    %vm208 = vweird.f32 %v202
    %vm209 = vweird.f32 %v203
    %vm210 = vmor %vm208, %vm209
    %v211 = vsel %vm210, %v203, %v207
    %v212 = vand.u32 2147483647, %v202
    %vm213 = vcmp.eq.f32.partialorder %v212, 8.507059e+37
    %v214 = vand.u32 %v202, 2147483648
    %v215 = vor.u32 1.1754944e-38, %v214
    %v216 = vsel %vm213, %v215, %v211
    %v217 = vmul.f32 %v216, 32.0
    %v219 = vsel %vm191, %v189, 0
    %vm221 = vcmask 1043456
    %v223 = vsel %vm221, %v76, 0
    %225 = vmatpush.msra.mxu0 0.0
    %226 = vmatpush.msra.mxu0 0.0
    %227 = vmatpush.msra.mxu0 0.0
    %228 = vmatpush.msra.mxu0 0.0
    %229 = vmatpush.msra.mxu0 0.0
    %230 = vmatpush.msra.mxu0 0.0
    %231 = vmatpush.msra.mxu0 0.0
    %232 = vmatpush.msra.mxu0 0.0
    %233 = vmatpush.msra.mxu0 0.0
    %234 = vmatpush.msra.mxu0 0.0
    %235 = vmatpush.msra.mxu0 0.0
    %236 = vmatpush.msra.mxu0 0.0
    %237 = vmatpush.msra.mxu0 0.0
    %238 = vmatpush.msra.mxu0 0.0
    %239 = vmatpush.msra.mxu0 0.0
    %240 = vmatpush.msra.mxu0 %v223
    %241 = vmatmul.f32.gmra.mxu0 %v219
    %v242 = vpop.f32.mrf.mxu0
    %v243 = vadd.f32 0.0, %v242
    %244 = vdwg.mxu0
    %v245 = vmul.f32 %v217, %v243
    %v246 = vperm.slane %v78, 0
    %v247 = vadd.f32 %v245, %v246
    %248 = vst.msk [vmem:[%s3] sm:$0xff] %vm191, %v247
    // Predicated region
    $region26: #{tpu_custom_call.1} parent=1 // pred_check
      _
    $region27: #{tpu_custom_call.1} parent=1 // pred_check_branch
      %250 = sbr.rel (0) target = $region29
    $region28: #{tpu_custom_call.1} parent=1 // pred_region
      _
    $region29: #{tpu_custom_call.1} parent=1 // pred_fallthru
      _
    // Predicated region
    $region30: #{tpu_custom_call.1} parent=1 // pred_check
      _
    $region31: #{tpu_custom_call.1} parent=1 // pred_check_branch
      %252 = sbr.rel (0) target = $region33
    $region32: #{tpu_custom_call.1} parent=1 // pred_region
      _
    $region33: #{tpu_custom_call.1} parent=1 // pred_fallthru
      _
    %253 = vsyncpa [#allocation3], 1
    %254 = vsyncpa [#allocation5], 1

</llo_original>
